<compile_context>
chip_gen: v6e
topology: v6e:2x2x1
jax: 0.10.0
libtpu: 0.0.40
codegen_flags: <defaults>
</compile_context>

<pallas_src>
import numpy as np
import jax
import jax.numpy as jnp
from jax.experimental import pallas as pl
from jax.experimental.pallas import tpu as pltpu

action_size = 4

maze = np.array([[-1, -1, -1, -1, -1, -1, -1],
                 [-1,  0,  0, -1,  0,  1, -1],
                 [-1,  0,  0, -1,  0,  0, -1],
                 [-1,  0,  0, -1,  0,  0, -1],
                 [-1,  0,  0, -1,  0,  0, -1],
                 [-1,  0,  0,  0,  0,  0, -1],
                 [-1, -1, -1, -1, -1, -1, -1]])

IN_FEATURES = maze.shape[0] * maze.shape[1]     # 49
HIDDEN = 32
OUT_PAD = 128                                   # 4 -> 128 (lane-dense output stores)
NEG_BIG = -1e9                                  # bias pad -> exp() == 0 for fake actions


def _round_up(x, m):
    return ((x + m - 1) // m) * m


def actor_kernel(s_ref, w1_ref, b1_ref, w2_ref, b2_ref, out_ref):
    # Cast streamed f32 states to bf16 in-kernel (VPU work hidden under DMA).
    s_bf = s_ref[...].astype(jnp.bfloat16)
    # fc1 + relu: bf16 MXU matmul, f32 accumulate.
    h = jnp.dot(s_bf, w1_ref[...], preferred_element_type=jnp.float32)
    h = jnp.maximum(h + b1_ref[...], 0.0)                     # (TB, 32) + (1, 32)
    # fc2: tiny, but the MXU push slot is otherwise idle -- keep it there.
    logits = jnp.dot(h.astype(jnp.bfloat16), w2_ref[...],
                     preferred_element_type=jnp.float32)
    logits = logits + b2_ref[...]                             # (TB, 128) + (1, 128)
    # Padded columns carry bias -1e9 (and zero W2 columns), so exp() underflows
    # to 0 and the softmax over 128 lanes equals the softmax over 4 real actions.
    m = jnp.max(logits, axis=-1, keepdims=True)
    e = jnp.exp(logits - m)
    denom = jnp.sum(e, axis=-1, keepdims=True)
    inv = pl.reciprocal(denom)                                # exact: rows sum to 1
    out_ref[...] = (e * inv).astype(out_ref.dtype)            # bf16 writeback


def actor_forward(s, padded_params, *, block_b=4096, min_steps=8):
    """s: (B, IN_FEATURES) float. Returns (B, action_size) f32 action probabilities."""
    w1, b1, w2, b2 = padded_params
    B = s.shape[0]

    # Adaptive tile: big enough to amortize per-step overhead, small enough to
    # keep >= min_steps grid steps (megacore / pipeline) and <= 1 tile of tail pad.
    TB = max(16, min(block_b, _round_up(pl.cdiv(B, min_steps), 16)))
    grid_b = pl.cdiv(B, TB)
    B_pad = grid_b * TB

    # Batch-pad only (no feature pad, no dtype cast here).
    if B_pad != B:
        s_in = jnp.zeros((B_pad, IN_FEATURES), s.dtype).at[:B].set(s)
    else:
        s_in = s

    weight_bytes = (w1.size * 2 + b1.size * 4 + w2.size * 2 + b2.size * 4)
    cost = pl.CostEstimate(
        flops=2 * B_pad * (IN_FEATURES * HIDDEN + HIDDEN * OUT_PAD),
        transcendentals=B_pad * OUT_PAD,
        bytes_accessed=B_pad * (IN_FEATURES * 4 + OUT_PAD * 2) + weight_bytes,
    )

    out = pl.pallas_call(
        actor_kernel,
        out_shape=jax.ShapeDtypeStruct((B_pad, OUT_PAD), jnp.bfloat16),
        grid=(grid_b,),
        in_specs=[
            pl.BlockSpec((TB, IN_FEATURES), lambda i: (i, 0)),     # streamed states
            pl.BlockSpec((IN_FEATURES, HIDDEN), lambda i: (0, 0)),  # VMEM-resident weights
            pl.BlockSpec((1, HIDDEN), lambda i: (0, 0)),
            pl.BlockSpec((HIDDEN, OUT_PAD), lambda i: (0, 0)),
            pl.BlockSpec((1, OUT_PAD), lambda i: (0, 0)),
        ],
        out_specs=pl.BlockSpec((TB, OUT_PAD), lambda i: (i, 0)),
        compiler_params=pltpu.CompilerParams(
            dimension_semantics=("parallel",),   # 2 TCs on v7x; no-op on v5e/v6e
        ),
        cost_estimate=cost,
    )(s_in, w1, b1, w2, b2)

    # Module semantics: (B, action_size) probabilities. The slice is tiny;
    # downstream consumers that can take the padded (B_pad, 128) bf16 slab
    # should use `out` directly and skip this re-read.
    return out[:B, :action_size].astype(jnp.float32)


def init_params(key):
    """PyTorch nn.Linear-style init (uniform +/- 1/sqrt(fan_in)), weights stored
    pre-transposed as (in, out); kernel-side copies padded/bf16-cast ONCE here."""
    k1, k2, k3, k4 = jax.random.split(key, 4)
    bound1 = 1.0 / np.sqrt(IN_FEATURES)
    bound2 = 1.0 / np.sqrt(HIDDEN)
    w1 = jax.random.uniform(k1, (IN_FEATURES, HIDDEN), jnp.float32, -bound1, bound1)
    b1 = jax.random.uniform(k2, (1, HIDDEN), jnp.float32, -bound1, bound1)
    w2 = jax.random.uniform(k3, (HIDDEN, action_size), jnp.float32, -bound2, bound2)
    b2 = jax.random.uniform(k4, (1, action_size), jnp.float32, -bound2, bound2)

    # Kernel-side copies: w1 bf16 unpadded (49, 32); w2 padded 4->128 with zero
    # columns; b2 padded with -1e9 so fake actions vanish in the softmax.
    w1_p = w1.astype(jnp.bfloat16)
    w2_p = jnp.zeros((HIDDEN, OUT_PAD), jnp.float32).at[:, :action_size].set(w2)
    w2_p = w2_p.astype(jnp.bfloat16)
    b2_p = jnp.full((1, OUT_PAD), NEG_BIG, jnp.float32).at[:, :action_size].set(b2)

    padded = (w1_p, b1, w2_p, b2_p)
    raw = (w1, b1, w2, b2)
    return padded, raw


def actor_ref(s, raw_params):
    """Plain-JAX reference with matching bf16 matmul inputs / f32 accumulation."""
    w1, b1, w2, b2 = raw_params
    s_bf = s.astype(jnp.bfloat16).astype(jnp.float32)
    w1_f = w1.astype(jnp.bfloat16).astype(jnp.float32)
    h = jnp.maximum(s_bf @ w1_f + b1, 0.0)
    h_bf = h.astype(jnp.bfloat16).astype(jnp.float32)
    w2_f = w2.astype(jnp.bfloat16).astype(jnp.float32)
    logits = h_bf @ w2_f + b2
    return jax.nn.softmax(logits, axis=-1)


if __name__ == "__main__":
    key = jax.random.PRNGKey(0)
    pkey, skey = jax.random.split(key)
    padded_params, raw_params = init_params(pkey)

    # Small batch of flattened maze-like states, shape (2, 49).
    B = 2
    base = jnp.asarray(maze.reshape(-1), dtype=jnp.float32)          # (49,)
    noise = jax.random.normal(skey, (B, IN_FEATURES), jnp.float32) * 0.1
    s = jnp.broadcast_to(base, (B, IN_FEATURES)) + noise             # (2, 49)

    out = actor_forward(s, padded_params)
    out = jax.block_until_ready(out)

    p_ref = actor_ref(s, raw_params)
    assert out.shape == (B, action_size)
    # Tolerances cover bf16 matmul inputs + bf16 probability writeback.
    assert bool(jnp.allclose(out, p_ref, atol=2e-2, rtol=2e-2))
    assert bool(jnp.allclose(jnp.sum(out, axis=-1), jnp.ones((B,)), atol=2e-2))

    print("KERNEL_OK")
</pallas_src>

<mosaic_0001>
module attributes {stable_mosaic.version = 11 : i64} {
  func.func @actor_kernel(%arg0: i32, %arg1: memref<16x49xf32, #tpu.memory_space<vmem>>, %arg2: memref<49x32xbf16, #tpu.memory_space<vmem>>, %arg3: memref<1x32xf32, #tpu.memory_space<vmem>>, %arg4: memref<32x128xbf16, #tpu.memory_space<vmem>>, %arg5: memref<1x128xf32, #tpu.memory_space<vmem>>, %arg6: memref<16x128xbf16, #tpu.memory_space<vmem>>) attributes {dimension_semantics = [#tpu.dimension_semantics<parallel>], iteration_bounds = array<i64: 1>, scalar_prefetch = 0 : i64, scratch_operands = 0 : i64, tpu.core_type = #tpu.core_type<tc>, window_params = [{transform_indices = @transform_0, window_bounds = array<i64: 16, 49>}, {pipeline_mode = #tpu.pipeline_mode<synchronous>, transform_indices = @transform_1, window_bounds = array<i64: 49, 32>}, {pipeline_mode = #tpu.pipeline_mode<synchronous>, transform_indices = @transform_2, window_bounds = array<i64: 1, 32>}, {pipeline_mode = #tpu.pipeline_mode<synchronous>, transform_indices = @transform_3, window_bounds = array<i64: 32, 128>}, {pipeline_mode = #tpu.pipeline_mode<synchronous>, transform_indices = @transform_4, window_bounds = array<i64: 1, 128>}, {transform_indices = @transform_5, window_bounds = array<i64: 16, 128>}]} {
    %c0 = arith.constant 0 : index
    %c0_0 = arith.constant 0 : index
    %0 = vector.load %arg1[%c0, %c0_0] : memref<16x49xf32, #tpu.memory_space<vmem>>, vector<16x49xf32>
    %1 = arith.truncf %0 : vector<16x49xf32> to vector<16x49xbf16>
    %c0_1 = arith.constant 0 : index
    %c0_2 = arith.constant 0 : index
    %2 = vector.load %arg2[%c0_1, %c0_2] : memref<49x32xbf16, #tpu.memory_space<vmem>>, vector<49x32xbf16>
    %cst = arith.constant dense<0.000000e+00> : vector<16x32xf32>
    %3 = tpu.matmul %1, %2, %cst {dimension_numbers = #tpu.dot_dimension_numbers<[1], [0], [0], [1], [0, 0, 1, 1], [], []>} : vector<16x49xbf16>, vector<49x32xbf16>, vector<16x32xf32> -> vector<16x32xf32>
    %c0_3 = arith.constant 0 : index
    %c0_4 = arith.constant 0 : index
    %4 = vector.load %arg3[%c0_3, %c0_4] : memref<1x32xf32, #tpu.memory_space<vmem>>, vector<1x32xf32>
    %5 = vector.broadcast %4 : vector<1x32xf32> to vector<16x32xf32>
    %6 = arith.addf %3, %5 : vector<16x32xf32>
    %cst_5 = arith.constant 0.000000e+00 : f32
    %7 = vector.broadcast %cst_5 : f32 to vector<16x32xf32>
    %8 = arith.maximumf %6, %7 : vector<16x32xf32>
    %9 = arith.truncf %8 : vector<16x32xf32> to vector<16x32xbf16>
    %c0_6 = arith.constant 0 : index
    %c0_7 = arith.constant 0 : index
    %10 = vector.load %arg4[%c0_6, %c0_7] : memref<32x128xbf16, #tpu.memory_space<vmem>>, vector<32x128xbf16>
    %cst_8 = arith.constant dense<0.000000e+00> : vector<16x128xf32>
    %11 = tpu.matmul %9, %10, %cst_8 {dimension_numbers = #tpu.dot_dimension_numbers<[1], [0], [0], [1], [0, 0, 1, 1], [], []>} : vector<16x32xbf16>, vector<32x128xbf16>, vector<16x128xf32> -> vector<16x128xf32>
    %c0_9 = arith.constant 0 : index
    %c0_10 = arith.constant 0 : index
    %12 = vector.load %arg5[%c0_9, %c0_10] : memref<1x128xf32, #tpu.memory_space<vmem>>, vector<1x128xf32>
    %13 = vector.broadcast %12 : vector<1x128xf32> to vector<16x128xf32>
    %14 = arith.addf %11, %13 : vector<16x128xf32>
    %cst_11 = arith.constant dense<0xFF800000> : vector<16xf32>
    %15 = vector.multi_reduction <maximumf>, %14, %cst_11 [1] : vector<16x128xf32> to vector<16xf32>
    %16 = vector.shape_cast %15 : vector<16xf32> to vector<16x1xf32>
    %17 = vector.broadcast %16 : vector<16x1xf32> to vector<16x128xf32>
    %18 = arith.subf %14, %17 : vector<16x128xf32>
    %19 = math.exp %18 : vector<16x128xf32>
    %cst_12 = arith.constant dense<0.000000e+00> : vector<16xf32>
    %20 = vector.multi_reduction <add>, %19, %cst_12 [1] : vector<16x128xf32> to vector<16xf32>
    %21 = vector.shape_cast %20 : vector<16xf32> to vector<16x1xf32>
    %22 = tpu.reciprocal %21 : vector<16x1xf32> -> vector<16x1xf32>
    %23 = vector.broadcast %22 : vector<16x1xf32> to vector<16x128xf32>
    %24 = arith.mulf %19, %23 : vector<16x128xf32>
    %25 = arith.truncf %24 : vector<16x128xf32> to vector<16x128xbf16>
    %c0_13 = arith.constant 0 : index
    %c0_14 = arith.constant 0 : index
    %26 = vector.load %arg6[%c0_13, %c0_14] : memref<16x128xbf16, #tpu.memory_space<vmem>>, vector<16x128xbf16>
    tpu.vector_store %arg6[%c0_13, %c0_14], %25 {strides = array<i32>} : memref<16x128xbf16, #tpu.memory_space<vmem>>, vector<16x128xbf16>,
    return
  }
  func.func @transform_0(%arg0: i32) -> (i32, i32) {
    %c0_i32 = arith.constant 0 : i32
    %c0_i32_0 = arith.constant 0 : i32
    return %arg0, %c0_i32 : i32, i32
  }
  func.func @transform_1(%arg0: i32) -> (i32, i32) {
    %c0_i32 = arith.constant 0 : i32
    %c0_i32_0 = arith.constant 0 : i32
    %c0_i32_1 = arith.constant 0 : i32
    return %c0_i32, %c0_i32_0 : i32, i32
  }
  func.func @transform_2(%arg0: i32) -> (i32, i32) {
    %c0_i32 = arith.constant 0 : i32
    %c0_i32_0 = arith.constant 0 : i32
    %c0_i32_1 = arith.constant 0 : i32
    return %c0_i32, %c0_i32_0 : i32, i32
  }
  func.func @transform_3(%arg0: i32) -> (i32, i32) {
    %c0_i32 = arith.constant 0 : i32
    %c0_i32_0 = arith.constant 0 : i32
    %c0_i32_1 = arith.constant 0 : i32
    return %c0_i32, %c0_i32_0 : i32, i32
  }
  func.func @transform_4(%arg0: i32) -> (i32, i32) {
    %c0_i32 = arith.constant 0 : i32
    %c0_i32_0 = arith.constant 0 : i32
    %c0_i32_1 = arith.constant 0 : i32
    return %c0_i32, %c0_i32_0 : i32, i32
  }
  func.func @transform_5(%arg0: i32) -> (i32, i32) {
    %c0_i32 = arith.constant 0 : i32
    %c0_i32_0 = arith.constant 0 : i32
    return %arg0, %c0_i32 : i32, i32
  }
}

</mosaic_0001>

<llo_original>
// kernel: tpu_custom_call.1
$region0: #{tpu_custom_call.1}
  #allocation0 [shape = 'u32[]', space=smem, size = 0x4, offset = 0x4, fixed_abs, tag = 'smem constant byte address 0x4 - core index']
  #allocation1 [shape = 'u32[144,128]{1,0:T(1,128)}', space=vmem, size = 0x12000, scoped, tag = 'internal scratch']
  %s0 = inlined_call_operand.vmem [shape: f32[16,49], index: 0, kind: input, shape index: {}]
  %s1 = inlined_call_operand.vmem [shape: bf16[49,32], index: 1, kind: input, shape index: {}]
  %s2 = inlined_call_operand.vmem [shape: f32[1,32], index: 2, kind: input, shape index: {}]
  %s3 = inlined_call_operand.vmem [shape: bf16[32,128], index: 3, kind: input, shape index: {}]
  %s4 = inlined_call_operand.vmem [shape: f32[1,128], index: 4, kind: input, shape index: {}]
  %s5 = inlined_call_operand.hbm [shape: bf16[16,128], index: 5, kind: output, shape index: {}]
  %s6 = sld [smem:[#allocation0]]
  $region30: #{tpu_custom_call.1} parent=0
    _
  %s8 = ssub.s32 1, %s6
  %s9 = scalar_select 0, %s8, %s6
  $region1: #{tpu_custom_call.1} parent=0
    #allocation2 [shape = 'u8[4096]{0}', space=vmem, size = 0x1000, scoped, tag = 'output window, operand 0, single buffered']
    #allocation3 [shape = 's32[1]{0}', space=sflag, size = 0x4, scoped, tag = 'scoped memory for tpu_custom_call.1']
    %10 = vsyncpa [#allocation3], 0
    // Predicated region
    $region2: #{tpu_custom_call.1} parent=1 // pred_check
      _
    $region3: #{tpu_custom_call.1} parent=1 // pred_check_branch
      %12 = sbr.rel (0) target = $region5
    $region4: #{tpu_custom_call.1} parent=1 // pred_region
      _
    $region5: #{tpu_custom_call.1} parent=1 // pred_fallthru
      _
    // Predicated region
    $region6: #{tpu_custom_call.1} parent=1 // pred_check
      _
    $region7: #{tpu_custom_call.1} parent=1 // pred_check_branch
      %14 = sbr.rel (0) target = $region9
    $region8: #{tpu_custom_call.1} parent=1 // pred_region
      _
    $region9: #{tpu_custom_call.1} parent=1 // pred_fallthru
      _
    // Predicated region
    $region10: #{tpu_custom_call.1} parent=1 // pred_check
      _
    $region11: #{tpu_custom_call.1} parent=1 // pred_check_branch
      %16 = sbr.rel (0) target = $region13
    $region12: #{tpu_custom_call.1} parent=1 // pred_region
      _
    $region13: #{tpu_custom_call.1} parent=1 // pred_fallthru
      _
    // Predicated region
    $region14: #{tpu_custom_call.1} parent=1 // pred_check
      _
    $region15: #{tpu_custom_call.1} parent=1 // pred_check_branch
      %18 = sbr.rel (0) target = $region17
    $region16: #{tpu_custom_call.1} parent=1 // pred_region
      _
    $region17: #{tpu_custom_call.1} parent=1 // pred_fallthru
      _
    // Predicated region
    $region18: #{tpu_custom_call.1} parent=1 // pred_check
      _
    $region19: #{tpu_custom_call.1} parent=1 // pred_check_branch
      %20 = sbr.rel (0) target = $region21
    $region20: #{tpu_custom_call.1} parent=1 // pred_region
      _
    $region21: #{tpu_custom_call.1} parent=1 // pred_fallthru
      _
    %v22 = vld [vmem:[%s0] sm:$0xff]
    %v23 = vld [vmem:[%s0 + $0x8] sm:$0xff]
    %v24 = vpack.c.bf16 %v23, %v22
    %v25 = vld [vmem:[%s1] sm:$0xf]
    %v26 = vld [vmem:[%s1 + $0x4] sm:$0xf]
    %v27 = vld [vmem:[%s1 + $0x8] sm:$0xf]
    %v28 = vld [vmem:[%s1 + $0xc] sm:$0xf]
    %v29 = vld [vmem:[%s1 + $0x10] sm:$0xf]
    %v30 = vld [vmem:[%s1 + $0x14] sm:$0xf]
    %v31 = vld [vmem:[%s1 + $0x18] sm:$0x1]
    %v32 = vld [vmem:[%s2] sm:$0x1]
    %v34 = vlaneseq
    %v35 = vshrl.u32 %v34, 7
    %v36 = vsub.s32 0, %v35
    %v37 = vrot.slane %v32, %v36
    %v46 = vunpack.c.l.b16 %v25
    %v47 = vunpack.c.l.b16 %v26
    %v48 = vunpack.c.l.b16 %v27
    %v49 = vunpack.c.l.b16 %v28
    %v50 = vunpack.c.l.b16 %v29
    %v51 = vunpack.c.l.b16 %v30
    %v52 = vunpack.c.l.b16 %v31
    %v53 = vpack.c.b16 %v47, %v46
    %v54 = vpack.c.b16 %v49, %v48
    %v55 = vpack.c.b16 %v51, %v50
    %v56 = vpack.c.b16 %v52, %v52
    %vm60 = vcmask 400384
    %v62 = vsel %vm60, %v24, 0
    %vm64 = vcmask 1040384
    %v65 = vsel 0, 4294967295, 65535
    %v66 = vsel %vm64, %v65, 0
    %v68 = vand.u32 %v56, %v66
    %70 = vmatprep.subr.bf16.mxu0 0
    %71 = vmatpush1.bf16.msra.mxu0 0
    %72 = vmatprep.subr.bf16.mxu0 0
    %73 = vmatpush1.bf16.msra.mxu0 0
    %74 = vmatprep.subr.bf16.mxu0 0
    %75 = vmatpush1.bf16.msra.mxu0 0
    %76 = vmatprep.subr.bf16.mxu0 0
    %77 = vmatpush1.bf16.msra.mxu0 0
    %78 = vmatprep.subr.bf16.mxu0 0
    %79 = vmatpush1.bf16.msra.mxu0 %v68
    %80 = vmatprep.subr.bf16.mxu0 0
    %81 = vmatpush1.bf16.msra.mxu0 %v55
    %82 = vmatprep.subr.bf16.mxu0 0
    %83 = vmatpush1.bf16.msra.mxu0 %v54
    %84 = vmatprep.subr.bf16.mxu0 0
    %85 = vmatpush1.bf16.msra.mxu0 %v53
    %86 = vmatprep.subr.bf16.mxu0 0
    %87 = vmatpush2.bf16.msra.mxu0 0
    %88 = vmatprep.subr.bf16.mxu0 0
    %89 = vmatpush2.bf16.msra.mxu0 0
    %90 = vmatprep.subr.bf16.mxu0 0
    %91 = vmatpush2.bf16.msra.mxu0 0
    %92 = vmatprep.subr.bf16.mxu0 0
    %93 = vmatpush2.bf16.msra.mxu0 0
    %94 = vmatprep.subr.bf16.mxu0 0
    %95 = vmatpush2.bf16.msra.mxu0 0
    %96 = vmatprep.subr.bf16.mxu0 0
    %97 = vmatpush2.bf16.msra.mxu0 0
    %98 = vmatprep.subr.bf16.mxu0 0
    %99 = vmatpush2.bf16.msra.mxu0 0
    %100 = vmatprep.subr.bf16.mxu0 0
    %101 = vmatpush2.bf16.msra.mxu0 0
    %102 = vmatprep.mubr.bf16.mxu0 0
    %103 = vmatmul.mubr.bf16.gmra.mxu0 %v62
    %v104 = vpop.f32.mrf.mxu0
    %v105 = vadd.f32 %v37, %v104
    %v106 = vpop.f32.mrf.mxu0
    %v107 = vpop.f32.mrf.mxu0
    %v108 = vadd.f32 %v37, %v107
    %v109 = vpop.f32.mrf.mxu0
    %110 = vdwg.mxu0
    %v111 = vmax.f32 %v105, 0.0
    %v112 = vmax.f32 %v108, 0.0
    %v113 = vpack.c.bf16 %v112, %v111
    %v114 = vld [vmem:[%s3] sm:$0xf]
    %v115 = vld [vmem:[%s3 + $0x4] sm:$0xf]
    %v116 = vld [vmem:[%s3 + $0x8] sm:$0xf]
    %v117 = vld [vmem:[%s3 + $0xc] sm:$0xf]
    %v118 = vld [vmem:[%s4] sm:$0x1]
    %v120 = vlaneseq
    %v121 = vshrl.u32 %v120, 7
    %v122 = vsub.s32 0, %v121
    %v123 = vrot.slane %v118, %v122
    %v129 = vunpack.c.l.b16 %v114
    %v130 = vunpack.c.l.b16 %v115
    %v131 = vunpack.c.l.b16 %v116
    %v132 = vunpack.c.l.b16 %v117
    %v133 = vpack.c.b16 %v130, %v129
    %v134 = vpack.c.b16 %v132, %v131
    %vm137 = vcmask 261120
    %v139 = vsel %vm137, %v113, 0
    %141 = vmatprep.subr.bf16.mxu0 0
    %142 = vmatpush1.bf16.msra.mxu0 0
    %143 = vmatprep.subr.bf16.mxu0 0
    %144 = vmatpush1.bf16.msra.mxu0 0
    %145 = vmatprep.subr.bf16.mxu0 0
    %146 = vmatpush1.bf16.msra.mxu0 0
    %147 = vmatprep.subr.bf16.mxu0 0
    %148 = vmatpush1.bf16.msra.mxu0 0
    %149 = vmatprep.subr.bf16.mxu0 0
    %150 = vmatpush1.bf16.msra.mxu0 0
    %151 = vmatprep.subr.bf16.mxu0 0
    %152 = vmatpush1.bf16.msra.mxu0 0
    %153 = vmatprep.subr.bf16.mxu0 0
    %154 = vmatpush1.bf16.msra.mxu0 %v134
    %155 = vmatprep.subr.bf16.mxu0 0
    %156 = vmatpush1.bf16.msra.mxu0 %v133
    %157 = vmatprep.subr.bf16.mxu0 0
    %158 = vmatpush2.bf16.msra.mxu0 0
    %159 = vmatprep.subr.bf16.mxu0 0
    %160 = vmatpush2.bf16.msra.mxu0 0
    %161 = vmatprep.subr.bf16.mxu0 0
    %162 = vmatpush2.bf16.msra.mxu0 0
    %163 = vmatprep.subr.bf16.mxu0 0
    %164 = vmatpush2.bf16.msra.mxu0 0
    %165 = vmatprep.subr.bf16.mxu0 0
    %166 = vmatpush2.bf16.msra.mxu0 0
    %167 = vmatprep.subr.bf16.mxu0 0
    %168 = vmatpush2.bf16.msra.mxu0 0
    %169 = vmatprep.subr.bf16.mxu0 0
    %170 = vmatpush2.bf16.msra.mxu0 0
    %171 = vmatprep.subr.bf16.mxu0 0
    %172 = vmatpush2.bf16.msra.mxu0 0
    %173 = vmatprep.mubr.bf16.mxu0 0
    %174 = vmatmul.mubr.bf16.gmra.mxu0 %v139
    %v175 = vpop.f32.mrf.mxu0
    %v176 = vadd.f32 %v123, %v175
    %v177 = vpop.f32.mrf.mxu0
    %v178 = vpop.f32.mrf.mxu0
    %v179 = vadd.f32 %v123, %v178
    %v180 = vpop.f32.mrf.mxu0
    %181 = vdwg.mxu0
    %182 = vmax.xlane.f32.xlu0 %v176
    %v183 = vpop.xlane.xlu0 %182
    %184 = vmax.xlane.f32.xlu0 %v179
    %v185 = vpop.xlane.xlu0 %184
    %v186 = vsub.f32 %v176, %v183
    %v187 = vsub.f32 %v179, %v185
    %v188 = vmul.f32 %v186, 1.442695
    %v189 = vpow.pop %v188
    %v190 = vmul.f32 %v187, 1.442695
    %v191 = vpow.pop %v190
    %192 = vadd.xlane.f32.xlu0 %v189
    %v193 = vpop.xlane.xlu0 %192
    %194 = vadd.xlane.f32.xlu0 %v191
    %v195 = vpop.xlane.xlu0 %194
    %v196 = vrcp.pop %v193
    %v197 = vrcp.pop %v195
    %v198 = vmul.f32 %v189, %v196
    %v199 = vmul.f32 %v191, %v197
    %v200 = vpack.c.bf16 %v199, %v198
    %v202 = vunpack.c.l.b16 %v200
    %v203 = vunpack.c.h.b16 %v200
    %v204 = vpack.c.b16 %v202, %v202
    %v205 = vpack.c.b16 %v203, %v203
    %208 = vst [vmem:[#allocation2] sm:$0xf] %v204
    %209 = vst [vmem:[#allocation2 + $0x4] sm:$0xf] %v205
    // Predicated region
    $region22: #{tpu_custom_call.1} parent=1 // pred_check
      _
    $region23: #{tpu_custom_call.1} parent=1 // pred_check_branch
      %211 = sbr.rel (0) target = $region25
    $region24: #{tpu_custom_call.1} parent=1 // pred_region
      %s213 = ssub.s32 128, 128
      %214 = vsyncadd [#allocation3], %s213
      %s215 = sshll.u32 [#allocation2], 4
      %s216 = int_to_ptr.vmem [resolvable:$true] %s215
      %221 = dma.vmem_to_hbm [thread:$0]  %s216, 128, %s5, [#allocation3], 64, 64, 4
    $region25: #{tpu_custom_call.1} parent=1 // pred_fallthru
      _
    // Predicated region
    $region26: #{tpu_custom_call.1} parent=1 // pred_check
      _
    $region27: #{tpu_custom_call.1} parent=1 // pred_check_branch
      %223 = sbr.rel (0) target = $region29
    $region28: #{tpu_custom_call.1} parent=1 // pred_region
      %224 = dma.done [#allocation3], 128
    $region29: #{tpu_custom_call.1} parent=1 // pred_fallthru
      _
    %225 = vsyncpa [#allocation3], 1

</llo_original>
